<compile_context>
chip_gen: v7x
topology: tpu7x:2x2x1
jax: 0.10.0
libtpu: 0.0.40
codegen_flags: <defaults>
</compile_context>

<pallas_src>
import functools
import math

import jax
import jax.numpy as jnp
from jax import lax
from jax.experimental import pallas as pl
from jax.experimental.pallas import tpu as pltpu

_MB = 1024 * 1024


def _layernorm_f32(x, w, b, eps=1e-5):
    # x: (rows, D) f32; w/b: (1, D) f32
    mu = jnp.mean(x, axis=-1, keepdims=True)
    var = jnp.mean(jnp.square(x - mu), axis=-1, keepdims=True)
    return (x - mu) * lax.rsqrt(var + eps) * w + b


# --------------- attention kernel: LN1 -> MHA -> +residual ------------------
def _attn_kernel(use_mask,
                 x_ref, mask_ref, ln1_w, ln1_b,
                 w_qkv_ref, b_qkv_ref, w_out_ref, b_out_ref,
                 o_ref,
                 ln_scr, acc_scr):
    h_idx = pl.program_id(1)
    dh = w_out_ref.shape[1]

    @pl.when(h_idx == 0)
    def _init():
        x = x_ref[0].astype(jnp.float32)                       # (L, D)
        ln = _layernorm_f32(x, ln1_w[...], ln1_b[...])
        ln_scr[...] = ln.astype(jnp.bfloat16)                  # reused by every head
        acc_scr[...] = x + b_out_ref[...]                      # residual + out_proj bias

    # per-head QKV projection: bf16 operands, f32 accumulation on the MXU.
    # (1/sqrt(dh) is pre-folded into the q columns of w_qkv / b_qkv.)
    qkv = jnp.dot(ln_scr[...], w_qkv_ref[0],
                  preferred_element_type=jnp.float32) + b_qkv_ref[0]   # (L, 3*dh)
    q = qkv[:, :dh].astype(jnp.bfloat16)
    k = qkv[:, dh:2 * dh].astype(jnp.bfloat16)
    v = qkv[:, 2 * dh:].astype(jnp.bfloat16)

    # scores: contract the dh axis directly (no explicit k.T relayout).
    s = lax.dot_general(q, k, (((1,), (1,)), ((), ())),
                        preferred_element_type=jnp.float32)            # (L, L)
    if use_mask:
        s = s + mask_ref[...].astype(jnp.float32)

    # softmax in f32; denominator via the approximate (EUP) reciprocal.
    s = s - jnp.max(s, axis=-1, keepdims=True)
    p = jnp.exp(s)
    p = p * pl.reciprocal(jnp.sum(p, axis=-1, keepdims=True), approx=True)

    o_h = jnp.dot(p.astype(jnp.bfloat16), v,
                  preferred_element_type=jnp.float32)                  # (L, dh)

    # fold this head straight into the output projection (no concatenate).
    acc_scr[...] += jnp.dot(o_h.astype(jnp.bfloat16), w_out_ref[0],
                            preferred_element_type=jnp.float32)        # (L, D)

    @pl.when(h_idx == pl.num_programs(1) - 1)
    def _finalize():
        o_ref[0] = acc_scr[...].astype(o_ref.dtype)


# --------------- MLP kernel: LN2 -> c_fc -> QuickGELU -> c_proj -> +residual -
def _mlp_kernel(x_ref, ln2_w, ln2_b, w_fc_ref, b_fc_ref, w_proj_ref, b_proj_ref,
                o_ref):
    x = x_ref[...].astype(jnp.float32)                                 # (bm, D)
    h = _layernorm_f32(x, ln2_w[...], ln2_b[...])
    fc = jnp.dot(h.astype(jnp.bfloat16), w_fc_ref[...],
                 preferred_element_type=jnp.float32) + b_fc_ref[...]
    g = fc * jax.nn.sigmoid(1.702 * fc)                                # QuickGELU, f32
    proj = jnp.dot(g.astype(jnp.bfloat16), w_proj_ref[...],
                   preferred_element_type=jnp.float32) + b_proj_ref[...]
    o_ref[...] = (x + proj).astype(o_ref.dtype)


def _row_block(total, target=256):
    """Largest multiple-of-8 divisor of `total` that is <= target (else total)."""
    if total <= target:
        return total
    for cand in range(target, 7, -1):
        if total % cand == 0 and cand % 8 == 0:
            return cand
    return total


def residual_attention_block(x, kparams, n_head, attn_mask=None, mlp_row_block=256):
    """x: (L, N, D) seq-first.  kparams: output of prepare_params()."""
    (ln1_w, ln1_b, w_qkv_r, b_qkv_r, w_out_r, b_out,
     ln2_w, ln2_b, w_fc, b_fc, w_proj, b_proj) = kparams
    L, N, D = x.shape
    H = n_head
    dh = D // H
    ib = x.dtype.itemsize

    use_mask = attn_mask is not None
    mask = (attn_mask.astype(jnp.float32) if use_mask
            else jnp.zeros((L, L), jnp.float32))

    xb = jnp.transpose(x, (1, 0, 2))                    # (N, L, D): contiguous per-batch blocks

    # ---- kernel 1: attention, grid (N heads-of-batch "parallel", H "arbitrary") ----
    # TODO(synk): for very long sequences (e.g. ViT-L/14@336, L=577) also tile the
    # query rows so both v7x TensorCores stay busy at small batch.
    attn_vmem = 2 * (2 * L * D * ib + L * L * 4 + 2 * D * 4
                     + D * 3 * dh * 2 + 3 * dh * 4 + dh * D * 2 + D * 4)
    attn_vmem += L * D * 2 + L * D * 4                              # ln / acc scratch
    attn_vmem += L * 3 * dh * 4 + 3 * L * dh * 2 + 2 * L * L * 4 + 2 * L * D * 4
    attn_vmem = int(min(64 * _MB, max(32 * _MB, attn_vmem + 8 * _MB)))

    x1 = pl.pallas_call(
        functools.partial(_attn_kernel, use_mask),
        out_shape=jax.ShapeDtypeStruct((N, L, D), x.dtype),
        grid=(N, H),
        in_specs=[
            pl.BlockSpec((1, L, D), lambda n, h: (n, 0, 0)),        # x (resident across h)
            pl.BlockSpec((L, L), lambda n, h: (0, 0)),              # additive attention mask
            pl.BlockSpec((1, D), lambda n, h: (0, 0)),              # ln_1 weight
            pl.BlockSpec((1, D), lambda n, h: (0, 0)),              # ln_1 bias
            pl.BlockSpec((1, D, 3 * dh), lambda n, h: (h, 0, 0)),   # per-head qkv weight
            pl.BlockSpec((1, 1, 3 * dh), lambda n, h: (h, 0, 0)),   # per-head qkv bias
            pl.BlockSpec((1, dh, D), lambda n, h: (h, 0, 0)),       # per-head out-proj rows
            pl.BlockSpec((1, D), lambda n, h: (0, 0)),              # out-proj bias
        ],
        out_specs=pl.BlockSpec((1, L, D), lambda n, h: (n, 0, 0)),
        scratch_shapes=[pltpu.VMEM((L, D), jnp.bfloat16),           # ln1(x), shared by heads
                        pltpu.VMEM((L, D), jnp.float32)],           # f32 accumulator
        compiler_params=pltpu.CompilerParams(
            dimension_semantics=("parallel", "arbitrary"),
            vmem_limit_bytes=attn_vmem),
    )(xb, mask, ln1_w, ln1_b, w_qkv_r, b_qkv_r, w_out_r, b_out)

    # ---- kernel 2: MLP, row-tiled over the flattened (N*L, D) activations ----
    R = N * L
    bm = _row_block(R, mlp_row_block)
    x1f = x1.reshape(R, D)

    mlp_vmem = 2 * (2 * bm * D * ib + 2 * D * 4 + D * 4 * D * 2 + 4 * D * 4
                    + 4 * D * D * 2 + D * 4)
    mlp_vmem += 2 * bm * 4 * D * 4 + 2 * bm * D * 4
    mlp_vmem = int(min(64 * _MB, max(32 * _MB, mlp_vmem + 8 * _MB)))

    out = pl.pallas_call(
        _mlp_kernel,
        out_shape=jax.ShapeDtypeStruct((R, D), x.dtype),
        grid=(R // bm,),
        in_specs=[
            pl.BlockSpec((bm, D), lambda r: (r, 0)),
            pl.BlockSpec((1, D), lambda r: (0, 0)),
            pl.BlockSpec((1, D), lambda r: (0, 0)),
            pl.BlockSpec((D, 4 * D), lambda r: (0, 0)),
            pl.BlockSpec((1, 4 * D), lambda r: (0, 0)),
            pl.BlockSpec((4 * D, D), lambda r: (0, 0)),
            pl.BlockSpec((1, D), lambda r: (0, 0)),
        ],
        out_specs=pl.BlockSpec((bm, D), lambda r: (r, 0)),
        compiler_params=pltpu.CompilerParams(
            dimension_semantics=("parallel",),
            vmem_limit_bytes=mlp_vmem),
    )(x1f, ln2_w, ln2_b, w_fc, b_fc, w_proj, b_proj)

    return jnp.transpose(out.reshape(N, L, D), (1, 0, 2))   # back to (L, N, D)


def init_params(key, d_model):
    """Deterministic synthetic parameters, shapes matching the torch module.
    Linear weights are stored pre-transposed so the math is x @ W."""
    D = d_model
    ks = jax.random.split(key, 12)
    s = 0.02
    ln1_w = 1.0 + s * jax.random.normal(ks[0], (1, D), jnp.float32)
    ln1_b = s * jax.random.normal(ks[1], (1, D), jnp.float32)
    w_qkv = s * jax.random.normal(ks[2], (D, 3 * D), jnp.float32)   # in_proj_weight.T
    b_qkv = s * jax.random.normal(ks[3], (1, 3 * D), jnp.float32)
    w_out = s * jax.random.normal(ks[4], (D, D), jnp.float32)       # out_proj.weight.T
    b_out = s * jax.random.normal(ks[5], (1, D), jnp.float32)
    ln2_w = 1.0 + s * jax.random.normal(ks[6], (1, D), jnp.float32)
    ln2_b = s * jax.random.normal(ks[7], (1, D), jnp.float32)
    w_fc = s * jax.random.normal(ks[8], (D, 4 * D), jnp.float32)    # c_fc.weight.T
    b_fc = s * jax.random.normal(ks[9], (1, 4 * D), jnp.float32)
    w_proj = s * jax.random.normal(ks[10], (4 * D, D), jnp.float32) # c_proj.weight.T
    b_proj = s * jax.random.normal(ks[11], (1, D), jnp.float32)
    return (ln1_w, ln1_b, w_qkv, b_qkv, w_out, b_out,
            ln2_w, ln2_b, w_fc, b_fc, w_proj, b_proj)


def prepare_params(params, n_head, compute_dtype=jnp.bfloat16):
    """Convert f32 torch-layout params into the kernel layout:
      * matmul weights cast to bf16 (MXU accumulates in f32),
      * 1/sqrt(dh) folded into the q columns of the qkv projection,
      * qkv weight/bias and out-proj weight rearranged per head so BlockSpecs
        can stream exactly one head's slice per grid step."""
    (ln1_w, ln1_b, w_qkv, b_qkv, w_out, b_out,
     ln2_w, ln2_b, w_fc, b_fc, w_proj, b_proj) = params
    D = w_out.shape[0]
    H = n_head
    dh = D // H
    scale = 1.0 / math.sqrt(dh)

    def per_head_cols(w_cols):                       # (D, D) -> (H, D, dh)
        return jnp.transpose(w_cols.reshape(D, H, dh), (1, 0, 2))

    wq = per_head_cols(w_qkv[:, :D] * scale)
    wk = per_head_cols(w_qkv[:, D:2 * D])
    wv = per_head_cols(w_qkv[:, 2 * D:])
    w_qkv_r = jnp.concatenate([wq, wk, wv], axis=-1).astype(compute_dtype)   # (H, D, 3dh)

    bq = (b_qkv[0, :D] * scale).reshape(H, 1, dh)
    bk = b_qkv[0, D:2 * D].reshape(H, 1, dh)
    bv = b_qkv[0, 2 * D:].reshape(H, 1, dh)
    b_qkv_r = jnp.concatenate([bq, bk, bv], axis=-1).astype(jnp.float32)     # (H, 1, 3dh)

    w_out_r = w_out.reshape(H, dh, D).astype(compute_dtype)                  # (H, dh, D)

    return (ln1_w, ln1_b, w_qkv_r, b_qkv_r, w_out_r, b_out,
            ln2_w, ln2_b,
            w_fc.astype(compute_dtype), b_fc,
            w_proj.astype(compute_dtype), b_proj)


def reference_block(x, params, n_head, mask):
    """Pure-JAX f32 reference replicating the torch module (for verification)."""
    (ln1_w, ln1_b, w_qkv, b_qkv, w_out, b_out,
     ln2_w, ln2_b, w_fc, b_fc, w_proj, b_proj) = params
    L, N, D = x.shape
    dh = D // n_head

    def ln(t, w, b):
        mu = t.mean(-1, keepdims=True)
        var = jnp.square(t - mu).mean(-1, keepdims=True)
        return (t - mu) / jnp.sqrt(var + 1e-5) * w[0] + b[0]

    h = ln(x, ln1_w, ln1_b)
    qkv = h @ w_qkv + b_qkv[0]
    q, k, v = jnp.split(qkv, 3, axis=-1)

    def heads(t):  # (L, N, D) -> (N, H, L, dh)
        return jnp.transpose(t.reshape(L, N, n_head, dh), (1, 2, 0, 3))

    qh, kh, vh = heads(q), heads(k), heads(v)
    s = jnp.einsum('nhqd,nhkd->nhqk', qh, kh) / jnp.sqrt(dh) + mask
    p = jax.nn.softmax(s, axis=-1)
    o = jnp.einsum('nhqk,nhkd->nhqd', p, vh)
    o = jnp.transpose(o, (2, 0, 1, 3)).reshape(L, N, D)
    x1 = x + o @ w_out + b_out[0]
    h2 = ln(x1, ln2_w, ln2_b)
    fc = h2 @ w_fc + b_fc[0]
    g = fc * jax.nn.sigmoid(1.702 * fc)
    return x1 + g @ w_proj + b_proj[0]


if __name__ == "__main__":
    L, N, D, H = 8, 2, 32, 4                     # seq, batch, d_model, n_head
    key = jax.random.PRNGKey(0)
    kx, kp = jax.random.split(key)
    x = jax.random.normal(kx, (L, N, D), jnp.float32)
    params = init_params(kp, D)
    kparams = prepare_params(params, H)

    # attn_mask=None in the module's default constructor.
    out = residual_attention_block(x, kparams, H, attn_mask=None)
    out = jax.block_until_ready(out)

    ref = reference_block(x, params, H, jnp.zeros((L, L), jnp.float32))
    assert out.shape == (L, N, D)
    # bf16 matmul operands (f32 accumulation) vs the f32 reference.
    assert jnp.allclose(out, ref, atol=1e-2, rtol=1e-2), "mismatch vs JAX reference"
    print("KERNEL_OK")
</pallas_src>

<mosaic_0001>
module attributes {stable_mosaic.version = 11 : i64} {
  func.func @_attn_kernel(%arg0: i32, %arg1: i32, %arg2: memref<1x8x32xf32, #tpu.memory_space<vmem>>, %arg3: memref<8x8xf32, #tpu.memory_space<vmem>>, %arg4: memref<1x32xf32, #tpu.memory_space<vmem>>, %arg5: memref<1x32xf32, #tpu.memory_space<vmem>>, %arg6: memref<1x32x24xbf16, #tpu.memory_space<vmem>>, %arg7: memref<1x1x24xf32, #tpu.memory_space<vmem>>, %arg8: memref<1x8x32xbf16, #tpu.memory_space<vmem>>, %arg9: memref<1x32xf32, #tpu.memory_space<vmem>>, %arg10: memref<1x8x32xf32, #tpu.memory_space<vmem>>, %arg11: memref<8x32xbf16, #tpu.memory_space<vmem>>, %arg12: memref<8x32xf32, #tpu.memory_space<vmem>>) attributes {dimension_semantics = [#tpu.dimension_semantics<parallel>, #tpu.dimension_semantics<arbitrary>], iteration_bounds = array<i64: 2, 4>, scalar_prefetch = 0 : i64, scratch_operands = 2 : i64, tpu.core_type = #tpu.core_type<tc>, window_params = [{transform_indices = @transform_0, window_bounds = array<i64: 1, 8, 32>}, {pipeline_mode = #tpu.pipeline_mode<synchronous>, transform_indices = @transform_1, window_bounds = array<i64: 8, 8>}, {pipeline_mode = #tpu.pipeline_mode<synchronous>, transform_indices = @transform_2, window_bounds = array<i64: 1, 32>}, {pipeline_mode = #tpu.pipeline_mode<synchronous>, transform_indices = @transform_3, window_bounds = array<i64: 1, 32>}, {transform_indices = @transform_4, window_bounds = array<i64: 1, 32, 24>}, {transform_indices = @transform_5, window_bounds = array<i64: 1, 1, 24>}, {transform_indices = @transform_6, window_bounds = array<i64: 1, 8, 32>}, {pipeline_mode = #tpu.pipeline_mode<synchronous>, transform_indices = @transform_7, window_bounds = array<i64: 1, 32>}, {transform_indices = @transform_8, window_bounds = array<i64: 1, 8, 32>}]} {
    %c0_i32 = arith.constant 0 : i32
    %0 = arith.cmpi eq, %arg1, %c0_i32 : i32
    %1 = arith.extui %0 : i1 to i32
    %c0_i32_0 = arith.constant 0 : i32
    %2 = arith.cmpi ne, %1, %c0_i32_0 : i32
    scf.if %2 {
      %c0_21 = arith.constant 0 : index
      %c0_22 = arith.constant 0 : index
      %c0_23 = arith.constant 0 : index
      %40 = vector.load %arg2[%c0_21, %c0_22, %c0_23] : memref<1x8x32xf32, #tpu.memory_space<vmem>>, vector<1x8x32xf32>
      %41 = vector.shape_cast %40 : vector<1x8x32xf32> to vector<8x32xf32>
      %c0_24 = arith.constant 0 : index
      %c0_25 = arith.constant 0 : index
      %42 = vector.load %arg4[%c0_24, %c0_25] : memref<1x32xf32, #tpu.memory_space<vmem>>, vector<1x32xf32>
      %c0_26 = arith.constant 0 : index
      %c0_27 = arith.constant 0 : index
      %43 = vector.load %arg5[%c0_26, %c0_27] : memref<1x32xf32, #tpu.memory_space<vmem>>, vector<1x32xf32>
      %cst_28 = arith.constant dense<0.000000e+00> : vector<8xf32>
      %44 = vector.multi_reduction <add>, %41, %cst_28 [1] : vector<8x32xf32> to vector<8xf32>
      %45 = vector.shape_cast %44 : vector<8xf32> to vector<8x1xf32>
      %cst_29 = arith.constant 3.200000e+01 : f32
      %46 = vector.broadcast %cst_29 : f32 to vector<8x1xf32>
      %47 = arith.divf %45, %46 : vector<8x1xf32>
      %48 = vector.broadcast %47 : vector<8x1xf32> to vector<8x32xf32>
      %49 = arith.subf %41, %48 : vector<8x32xf32>
      %50 = arith.mulf %49, %49 : vector<8x32xf32>
      %cst_30 = arith.constant dense<0.000000e+00> : vector<8xf32>
      %51 = vector.multi_reduction <add>, %50, %cst_30 [1] : vector<8x32xf32> to vector<8xf32>
      %52 = vector.shape_cast %51 : vector<8xf32> to vector<8x1xf32>
      %cst_31 = arith.constant 3.200000e+01 : f32
      %53 = vector.broadcast %cst_31 : f32 to vector<8x1xf32>
      %54 = arith.divf %52, %53 : vector<8x1xf32>
      %55 = vector.broadcast %47 : vector<8x1xf32> to vector<8x32xf32>
      %56 = arith.subf %41, %55 : vector<8x32xf32>
      %cst_32 = arith.constant 9.99999974E-6 : f32
      %57 = vector.broadcast %cst_32 : f32 to vector<8x1xf32>
      %58 = arith.addf %54, %57 : vector<8x1xf32>
      %59 = math.rsqrt %58 : vector<8x1xf32>
      %60 = vector.broadcast %59 : vector<8x1xf32> to vector<8x32xf32>
      %61 = arith.mulf %56, %60 : vector<8x32xf32>
      %62 = vector.broadcast %42 : vector<1x32xf32> to vector<8x32xf32>
      %63 = arith.mulf %61, %62 : vector<8x32xf32>
      %64 = vector.broadcast %43 : vector<1x32xf32> to vector<8x32xf32>
      %65 = arith.addf %63, %64 : vector<8x32xf32>
      %66 = arith.truncf %65 : vector<8x32xf32> to vector<8x32xbf16>
      %c0_33 = arith.constant 0 : index
      %c0_34 = arith.constant 0 : index
      %67 = vector.load %arg11[%c0_33, %c0_34] : memref<8x32xbf16, #tpu.memory_space<vmem>>, vector<8x32xbf16>
      tpu.vector_store %arg11[%c0_33, %c0_34], %66 {strides = array<i32>} : memref<8x32xbf16, #tpu.memory_space<vmem>>, vector<8x32xbf16>,
      %c0_35 = arith.constant 0 : index
      %c0_36 = arith.constant 0 : index
      %68 = vector.load %arg9[%c0_35, %c0_36] : memref<1x32xf32, #tpu.memory_space<vmem>>, vector<1x32xf32>
      %69 = vector.broadcast %68 : vector<1x32xf32> to vector<8x32xf32>
      %70 = arith.addf %41, %69 : vector<8x32xf32>
      %c0_37 = arith.constant 0 : index
      %c0_38 = arith.constant 0 : index
      %71 = vector.load %arg12[%c0_37, %c0_38] : memref<8x32xf32, #tpu.memory_space<vmem>>, vector<8x32xf32>
      tpu.vector_store %arg12[%c0_37, %c0_38], %70 {strides = array<i32>} : memref<8x32xf32, #tpu.memory_space<vmem>>, vector<8x32xf32>,
    } else {
    }
    %c0 = arith.constant 0 : index
    %c0_1 = arith.constant 0 : index
    %3 = vector.load %arg11[%c0, %c0_1] : memref<8x32xbf16, #tpu.memory_space<vmem>>, vector<8x32xbf16>
    %c0_2 = arith.constant 0 : index
    %c0_3 = arith.constant 0 : index
    %c0_4 = arith.constant 0 : index
    %4 = vector.load %arg6[%c0_2, %c0_3, %c0_4] : memref<1x32x24xbf16, #tpu.memory_space<vmem>>, vector<1x32x24xbf16>
    %5 = vector.shape_cast %4 : vector<1x32x24xbf16> to vector<32x24xbf16>
    %cst = arith.constant dense<0.000000e+00> : vector<8x24xf32>
    %6 = tpu.matmul %3, %5, %cst {dimension_numbers = #tpu.dot_dimension_numbers<[1], [0], [0], [1], [0, 0, 1, 1], [], []>} : vector<8x32xbf16>, vector<32x24xbf16>, vector<8x24xf32> -> vector<8x24xf32>
    %c0_5 = arith.constant 0 : index
    %c0_6 = arith.constant 0 : index
    %c0_7 = arith.constant 0 : index
    %7 = vector.load %arg7[%c0_5, %c0_6, %c0_7] : memref<1x1x24xf32, #tpu.memory_space<vmem>>, vector<1x1x24xf32>
    %8 = vector.shape_cast %7 : vector<1x1x24xf32> to vector<1x24xf32>
    %9 = vector.broadcast %8 : vector<1x24xf32> to vector<8x24xf32>
    %10 = arith.addf %6, %9 : vector<8x24xf32>
    %11 = vector.extract_strided_slice %10 {offsets = [0, 0], sizes = [8, 8], strides = [1, 1]} : vector<8x24xf32> to vector<8x8xf32>
    %12 = arith.truncf %11 : vector<8x8xf32> to vector<8x8xbf16>
    %13 = vector.extract_strided_slice %10 {offsets = [0, 8], sizes = [8, 8], strides = [1, 1]} : vector<8x24xf32> to vector<8x8xf32>
    %14 = arith.truncf %13 : vector<8x8xf32> to vector<8x8xbf16>
    %15 = vector.extract_strided_slice %10 {offsets = [0, 16], sizes = [8, 8], strides = [1, 1]} : vector<8x24xf32> to vector<8x8xf32>
    %16 = arith.truncf %15 : vector<8x8xf32> to vector<8x8xbf16>
    %cst_8 = arith.constant dense<0.000000e+00> : vector<8x8xf32>
    %17 = tpu.matmul %12, %14, %cst_8 {dimension_numbers = #tpu.dot_dimension_numbers<[1], [1], [0], [0], [0, 0, 1, 0], [], []>} : vector<8x8xbf16>, vector<8x8xbf16>, vector<8x8xf32> -> vector<8x8xf32>
    %cst_9 = arith.constant dense<0xFF800000> : vector<8xf32>
    %18 = vector.multi_reduction <maximumf>, %17, %cst_9 [1] : vector<8x8xf32> to vector<8xf32>
    %19 = vector.shape_cast %18 : vector<8xf32> to vector<8x1xf32>
    %20 = vector.broadcast %19 : vector<8x1xf32> to vector<8x8xf32>
    %21 = arith.subf %17, %20 : vector<8x8xf32>
    %22 = math.exp %21 : vector<8x8xf32>
    %cst_10 = arith.constant dense<0.000000e+00> : vector<8xf32>
    %23 = vector.multi_reduction <add>, %22, %cst_10 [1] : vector<8x8xf32> to vector<8xf32>
    %24 = vector.shape_cast %23 : vector<8xf32> to vector<8x1xf32>
    %25 = tpu.reciprocal %24 {approx = true} : vector<8x1xf32> -> vector<8x1xf32>
    %26 = vector.broadcast %25 : vector<8x1xf32> to vector<8x8xf32>
    %27 = arith.mulf %22, %26 : vector<8x8xf32>
    %28 = arith.truncf %27 : vector<8x8xf32> to vector<8x8xbf16>
    %cst_11 = arith.constant dense<0.000000e+00> : vector<8x8xf32>
    %29 = tpu.matmul %28, %16, %cst_11 {dimension_numbers = #tpu.dot_dimension_numbers<[1], [0], [0], [1], [0, 0, 1, 1], [], []>} : vector<8x8xbf16>, vector<8x8xbf16>, vector<8x8xf32> -> vector<8x8xf32>
    %c0_12 = arith.constant 0 : index
    %c0_13 = arith.constant 0 : index
    %30 = vector.load %arg12[%c0_12, %c0_13] : memref<8x32xf32, #tpu.memory_space<vmem>>, vector<8x32xf32>
    %31 = arith.truncf %29 : vector<8x8xf32> to vector<8x8xbf16>
    %c0_14 = arith.constant 0 : index
    %c0_15 = arith.constant 0 : index
    %c0_16 = arith.constant 0 : index
    %32 = vector.load %arg8[%c0_14, %c0_15, %c0_16] : memref<1x8x32xbf16, #tpu.memory_space<vmem>>, vector<1x8x32xbf16>
    %33 = vector.shape_cast %32 : vector<1x8x32xbf16> to vector<8x32xbf16>
    %cst_17 = arith.constant dense<0.000000e+00> : vector<8x32xf32>
    %34 = tpu.matmul %31, %33, %cst_17 {dimension_numbers = #tpu.dot_dimension_numbers<[1], [0], [0], [1], [0, 0, 1, 1], [], []>} : vector<8x8xbf16>, vector<8x32xbf16>, vector<8x32xf32> -> vector<8x32xf32>
    %35 = arith.addf %30, %34 : vector<8x32xf32>
    %c0_18 = arith.constant 0 : index
    %c0_19 = arith.constant 0 : index
    %36 = vector.load %arg12[%c0_18, %c0_19] : memref<8x32xf32, #tpu.memory_space<vmem>>, vector<8x32xf32>
    tpu.vector_store %arg12[%c0_18, %c0_19], %35 {strides = array<i32>} : memref<8x32xf32, #tpu.memory_space<vmem>>, vector<8x32xf32>,
    %c3_i32 = arith.constant 3 : i32
    %37 = arith.cmpi eq, %arg1, %c3_i32 : i32
    %38 = arith.extui %37 : i1 to i32
    %c0_i32_20 = arith.constant 0 : i32
    %39 = arith.cmpi ne, %38, %c0_i32_20 : i32
    scf.if %39 {
      %c0_21 = arith.constant 0 : index
      %c0_22 = arith.constant 0 : index
      %40 = vector.load %arg12[%c0_21, %c0_22] : memref<8x32xf32, #tpu.memory_space<vmem>>, vector<8x32xf32>
      %c0_23 = arith.constant 0 : index
      %c0_24 = arith.constant 0 : index
      %c0_25 = arith.constant 0 : index
      %41 = vector.load %arg10[%c0_23, %c0_24, %c0_25] : memref<1x8x32xf32, #tpu.memory_space<vmem>>, vector<1x8x32xf32>
      %42 = vector.shape_cast %41 : vector<1x8x32xf32> to vector<8x32xf32>
      %43 = vector.shape_cast %40 : vector<8x32xf32> to vector<1x8x32xf32>
      tpu.vector_store %arg10[%c0_23, %c0_24, %c0_25], %43 {strides = array<i32>} : memref<1x8x32xf32, #tpu.memory_space<vmem>>, vector<1x8x32xf32>,
    } else {
    }
    return
  }
  func.func @transform_0(%arg0: i32, %arg1: i32) -> (i32, i32, i32) {
    %c0_i32 = arith.constant 0 : i32
    %c0_i32_0 = arith.constant 0 : i32
    %c0_i32_1 = arith.constant 0 : i32
    return %arg0, %c0_i32, %c0_i32_0 : i32, i32, i32
  }
  func.func @transform_1(%arg0: i32, %arg1: i32) -> (i32, i32) {
    %c0_i32 = arith.constant 0 : i32
    %c0_i32_0 = arith.constant 0 : i32
    %c0_i32_1 = arith.constant 0 : i32
    return %c0_i32, %c0_i32_0 : i32, i32
  }
  func.func @transform_2(%arg0: i32, %arg1: i32) -> (i32, i32) {
    %c0_i32 = arith.constant 0 : i32
    %c0_i32_0 = arith.constant 0 : i32
    %c0_i32_1 = arith.constant 0 : i32
    return %c0_i32, %c0_i32_0 : i32, i32
  }
  func.func @transform_3(%arg0: i32, %arg1: i32) -> (i32, i32) {
    %c0_i32 = arith.constant 0 : i32
    %c0_i32_0 = arith.constant 0 : i32
    %c0_i32_1 = arith.constant 0 : i32
    return %c0_i32, %c0_i32_0 : i32, i32
  }
  func.func @transform_4(%arg0: i32, %arg1: i32) -> (i32, i32, i32) {
    %c0_i32 = arith.constant 0 : i32
    %c0_i32_0 = arith.constant 0 : i32
    %c0_i32_1 = arith.constant 0 : i32
    return %arg1, %c0_i32, %c0_i32_0 : i32, i32, i32
  }
  func.func @transform_5(%arg0: i32, %arg1: i32) -> (i32, i32, i32) {
    %c0_i32 = arith.constant 0 : i32
    %c0_i32_0 = arith.constant 0 : i32
    %c0_i32_1 = arith.constant 0 : i32
    return %arg1, %c0_i32, %c0_i32_0 : i32, i32, i32
  }
  func.func @transform_6(%arg0: i32, %arg1: i32) -> (i32, i32, i32) {
    %c0_i32 = arith.constant 0 : i32
    %c0_i32_0 = arith.constant 0 : i32
    %c0_i32_1 = arith.constant 0 : i32
    return %arg1, %c0_i32, %c0_i32_0 : i32, i32, i32
  }
  func.func @transform_7(%arg0: i32, %arg1: i32) -> (i32, i32) {
    %c0_i32 = arith.constant 0 : i32
    %c0_i32_0 = arith.constant 0 : i32
    %c0_i32_1 = arith.constant 0 : i32
    return %c0_i32, %c0_i32_0 : i32, i32
  }
  func.func @transform_8(%arg0: i32, %arg1: i32) -> (i32, i32, i32) {
    %c0_i32 = arith.constant 0 : i32
    %c0_i32_0 = arith.constant 0 : i32
    %c0_i32_1 = arith.constant 0 : i32
    return %arg0, %c0_i32, %c0_i32_0 : i32, i32, i32
  }
}

</mosaic_0001>

<llo_original>
// kernel: tpu_custom_call.1
$region0: #{tpu_custom_call.1}
  #allocation0 [shape = 'u32[]', space=smem, size = 0x4, offset = 0x4, fixed_abs, tag = 'smem constant byte address 0x4 - core index']
  #allocation1 [shape = 'u32[144,128]{1,0:T(1,128)}', space=vmem, size = 0x12000, scoped, tag = 'internal scratch']
  #allocation2 [shape = 'bf16[8,32]{1,0:T(8,128)(2,1)}', space=vmem, size = 0x800, scoped, tag = 'scratch operand']
  #allocation3 [shape = 'f32[8,32]{1,0:T(8,128)}', space=vmem, size = 0x1000, scoped, tag = 'scratch operand']
  %s0 = inlined_call_operand.vmem [shape: f32[2,8,32], index: 0, kind: input, shape index: {}]
  %s1 = inlined_call_operand.vmem [shape: f32[8,8], index: 1, kind: input, shape index: {}]
  %s2 = inlined_call_operand.vmem [shape: f32[1,32], index: 2, kind: input, shape index: {}]
  %s3 = inlined_call_operand.vmem [shape: f32[1,32], index: 3, kind: input, shape index: {}]
  %s4 = inlined_call_operand.vmem [shape: bf16[4,32,24], index: 4, kind: input, shape index: {}]
  %s5 = inlined_call_operand.vmem [shape: f32[4,1,24], index: 5, kind: input, shape index: {}]
  %s6 = inlined_call_operand.vmem [shape: bf16[4,8,32], index: 6, kind: input, shape index: {}]
  %s7 = inlined_call_operand.vmem [shape: f32[1,32], index: 7, kind: input, shape index: {}]
  %s8 = inlined_call_operand.hbm [shape: f32[2,8,32], index: 8, kind: output, shape index: {}]
  %s9 = sld [smem:[#allocation0]]
  $region73: #{tpu_custom_call.1} parent=0
    _
  %s11 = ssub.s32 1, %s9
  %s12 = scalar_select 0, %s11, %s9
  $region1: #{tpu_custom_call.1} parent=0
    #allocation4 [shape = 'u8[8192]{0}', space=vmem, size = 0x2000, scoped, tag = 'output window, operand 0']
    #allocation5 [shape = 's32[2]{0}', space=sflag, size = 0x8, scoped, tag = 'scoped memory for tpu_custom_call.1']
    %13 = vsyncpa [#allocation5], 0
    %s14 = scalar_lea.sflag [#allocation5], 1
    %15 = vsyncpa %s14, 0
    loop: start=0, step=1, limit=10
    $region2: #{tpu_custom_call.1} parent=1 // loop_pre_header
      _
    $region3: #{tpu_custom_call.1} parent=1 // loop_header
      %s17 = sphi 0, %s21
      %p18 = scmp.ge.s32.totalorder %s17, 10
      %s24 = sphi 0, %s36
      %s25 = sphi 0, %s32
      %s26 = sphi 0, %s24
      %s27 = sphi 0, %s25
      %s28 = sphi 0, %s26
      %s29 = sphi 0, %s27
      %s39 = sphi 0, %s41
      %s42 = sphi 0, %s39
      %s43 = sphi 0, %s42
      %s59 = sphi 0, %s43
      %s63 = sphi 0, %s63
      %s65 = sphi 0, %s63
      %s66 = sphi 0, %s65
      %s80 = sphi 0, %s66
      %s84 = sphi 0, %s84
      %s86 = sphi 0, %s84
      %s87 = sphi 0, %s86
      %s101 = sphi 0, %s87
      %s105 = sphi 0, %s105
      %s107 = sphi 0, %s105
      %s108 = sphi 0, %s107
      %s122 = sphi 0, %s108
      %s128 = sphi 0, %s130
      %s131 = sphi 0, %s128
      %s132 = sphi 0, %s131
      %s148 = sphi 0, %s132
      %s154 = sphi 0, %s156
      %s157 = sphi 0, %s154
      %s158 = sphi 0, %s157
      %s174 = sphi 0, %s158
      %s180 = sphi 0, %s182
      %s183 = sphi 0, %s180
      %s184 = sphi 0, %s183
      %s200 = sphi 0, %s184
      %s204 = sphi 0, %s204
      %s206 = sphi 0, %s204
      %s207 = sphi 0, %s206
      %s221 = sphi 0, %s207
      %s227 = sphi 0, %s229
      %s230 = sphi 0, %s227
      %s231 = sphi 0, %s230
      %s247 = sphi 0, %s231
    $region4: #{tpu_custom_call.1} parent=1 // loop_header_branch
      %20 = sbr.rel (%p18) target = $region8
    $region5: #{tpu_custom_call.1} parent=1 // loop_body
      %s22 = ssub.s32 %s17, 1
      %s23 = ssub.s32 %s17, 2
      %s30 = sadd.s32 1, %s25
      %p31 = scmp.ge.s32.totalorder %s30, 4
      %s32 = scalar_select %p31, 0, %s30
      %s33 = sadd.s32 1, %s24
      %s34 = scalar_select %p31, %s33, %s24
      %p35 = scmp.ge.s32.totalorder %s34, 2
      %s36 = scalar_select %p35, 0, %s34
      %s37 = ssub.s32 %s24, %s36
      %p38 = scmp.eq.s32.totalorder %s37, 0
      %s40 = sadd.s32 %s39, 1
      %s41 = scalar_select %p38, %s39, %s40
      %p44 = pneg %p38
      %p45 = scmp.eq.s32.totalorder %s17, 7
      %p46 = por %p44, %p45
      %p47 = scmp.ne.s32.totalorder %s39, %s42
      %p48 = scmp.eq.s32.totalorder %s17, 0
      %p49 = por %p47, %p48
      %p50 = scmp.ne.s32.totalorder %s39, %s42
      %p51 = scmp.eq.s32.totalorder %s22, 7
      %p52 = por %p50, %p51
      %p53 = scmp.ne.s32.totalorder %s42, %s43
      %p54 = scmp.eq.s32.totalorder %s22, 0
      %p55 = por %p53, %p54
      %p56 = scmp.ne.s32.totalorder %s42, %s43
      %p57 = scmp.eq.s32.totalorder %s23, 7
      %p58 = por %p56, %p57
      %p60 = scmp.ne.s32.totalorder %s43, %s59
      %p61 = scmp.eq.s32.totalorder %s23, 0
      %p62 = por %p60, %p61
      %s64 = sadd.s32 %s63, 1
      %p67 = scmp.eq.s32.totalorder %s17, 7
      %p68 = scmp.ne.s32.totalorder %s63, %s65
      %p69 = scmp.eq.s32.totalorder %s17, 0
      %p70 = por %p68, %p69
      %p71 = scmp.ne.s32.totalorder %s63, %s65
      %p72 = scmp.eq.s32.totalorder %s22, 7
      %p73 = por %p71, %p72
      %p74 = scmp.ne.s32.totalorder %s65, %s66
      %p75 = scmp.eq.s32.totalorder %s22, 0
      %p76 = por %p74, %p75
      %p77 = scmp.ne.s32.totalorder %s65, %s66
      %p78 = scmp.eq.s32.totalorder %s23, 7
      %p79 = por %p77, %p78
      %p81 = scmp.ne.s32.totalorder %s66, %s80
      %p82 = scmp.eq.s32.totalorder %s23, 0
      %p83 = por %p81, %p82
      %s85 = sadd.s32 %s84, 1
      %p88 = scmp.eq.s32.totalorder %s17, 7
      %p89 = scmp.ne.s32.totalorder %s84, %s86
      %p90 = scmp.eq.s32.totalorder %s17, 0
      %p91 = por %p89, %p90
      %p92 = scmp.ne.s32.totalorder %s84, %s86
      %p93 = scmp.eq.s32.totalorder %s22, 7
      %p94 = por %p92, %p93
      %p95 = scmp.ne.s32.totalorder %s86, %s87
      %p96 = scmp.eq.s32.totalorder %s22, 0
      %p97 = por %p95, %p96
      %p98 = scmp.ne.s32.totalorder %s86, %s87
      %p99 = scmp.eq.s32.totalorder %s23, 7
      %p100 = por %p98, %p99
      %p102 = scmp.ne.s32.totalorder %s87, %s101
      %p103 = scmp.eq.s32.totalorder %s23, 0
      %p104 = por %p102, %p103
      %s106 = sadd.s32 %s105, 1
      %p109 = scmp.eq.s32.totalorder %s17, 7
      %p110 = scmp.ne.s32.totalorder %s105, %s107
      %p111 = scmp.eq.s32.totalorder %s17, 0
      %p112 = por %p110, %p111
      %p113 = scmp.ne.s32.totalorder %s105, %s107
      %p114 = scmp.eq.s32.totalorder %s22, 7
      %p115 = por %p113, %p114
      %p116 = scmp.ne.s32.totalorder %s107, %s108
      %p117 = scmp.eq.s32.totalorder %s22, 0
      %p118 = por %p116, %p117
      %p119 = scmp.ne.s32.totalorder %s107, %s108
      %p120 = scmp.eq.s32.totalorder %s23, 7
      %p121 = por %p119, %p120
      %p123 = scmp.ne.s32.totalorder %s108, %s122
      %p124 = scmp.eq.s32.totalorder %s23, 0
      %p125 = por %p123, %p124
      %s126 = ssub.s32 %s25, %s32
      %p127 = scmp.eq.s32.totalorder %s126, 0
      %s129 = sadd.s32 %s128, 1
      %s130 = scalar_select %p127, %s128, %s129
      %p133 = pneg %p127
      %p134 = scmp.eq.s32.totalorder %s17, 7
      %p135 = por %p133, %p134
      %p136 = scmp.ne.s32.totalorder %s128, %s131
      %p137 = scmp.eq.s32.totalorder %s17, 0
      %p138 = por %p136, %p137
      %p139 = scmp.ne.s32.totalorder %s128, %s131
      %p140 = scmp.eq.s32.totalorder %s22, 7
      %p141 = por %p139, %p140
      %p142 = scmp.ne.s32.totalorder %s131, %s132
      %p143 = scmp.eq.s32.totalorder %s22, 0
      %p144 = por %p142, %p143
      %p145 = scmp.ne.s32.totalorder %s131, %s132
      %p146 = scmp.eq.s32.totalorder %s23, 7
      %p147 = por %p145, %p146
      %p149 = scmp.ne.s32.totalorder %s132, %s148
      %p150 = scmp.eq.s32.totalorder %s23, 0
      %p151 = por %p149, %p150
      %s152 = ssub.s32 %s25, %s32
      %p153 = scmp.eq.s32.totalorder %s152, 0
      %s155 = sadd.s32 %s154, 1
      %s156 = scalar_select %p153, %s154, %s155
      %p159 = pneg %p153
      %p160 = scmp.eq.s32.totalorder %s17, 7
      %p161 = por %p159, %p160
      %p162 = scmp.ne.s32.totalorder %s154, %s157
      %p163 = scmp.eq.s32.totalorder %s17, 0
      %p164 = por %p162, %p163
      %p165 = scmp.ne.s32.totalorder %s154, %s157
      %p166 = scmp.eq.s32.totalorder %s22, 7
      %p167 = por %p165, %p166
      %p168 = scmp.ne.s32.totalorder %s157, %s158
      %p169 = scmp.eq.s32.totalorder %s22, 0
      %p170 = por %p168, %p169
      %p171 = scmp.ne.s32.totalorder %s157, %s158
      %p172 = scmp.eq.s32.totalorder %s23, 7
      %p173 = por %p171, %p172
      %p175 = scmp.ne.s32.totalorder %s158, %s174
      %p176 = scmp.eq.s32.totalorder %s23, 0
      %p177 = por %p175, %p176
      %s178 = ssub.s32 %s25, %s32
      %p179 = scmp.eq.s32.totalorder %s178, 0
      %s181 = sadd.s32 %s180, 1
      %s182 = scalar_select %p179, %s180, %s181
      %p185 = pneg %p179
      %p186 = scmp.eq.s32.totalorder %s17, 7
      %p187 = por %p185, %p186
      %p188 = scmp.ne.s32.totalorder %s180, %s183
      %p189 = scmp.eq.s32.totalorder %s17, 0
      %p190 = por %p188, %p189
      %p191 = scmp.ne.s32.totalorder %s180, %s183
      %p192 = scmp.eq.s32.totalorder %s22, 7
      %p193 = por %p191, %p192
      %p194 = scmp.ne.s32.totalorder %s183, %s184
      %p195 = scmp.eq.s32.totalorder %s22, 0
      %p196 = por %p194, %p195
      %p197 = scmp.ne.s32.totalorder %s183, %s184
      %p198 = scmp.eq.s32.totalorder %s23, 7
      %p199 = por %p197, %p198
      %p201 = scmp.ne.s32.totalorder %s184, %s200
      %p202 = scmp.eq.s32.totalorder %s23, 0
      %p203 = por %p201, %p202
      %s205 = sadd.s32 %s204, 1
      %p208 = scmp.eq.s32.totalorder %s17, 7
      %p209 = scmp.ne.s32.totalorder %s204, %s206
      %p210 = scmp.eq.s32.totalorder %s17, 0
      %p211 = por %p209, %p210
      %p212 = scmp.ne.s32.totalorder %s204, %s206
      %p213 = scmp.eq.s32.totalorder %s22, 7
      %p214 = por %p212, %p213
      %p215 = scmp.ne.s32.totalorder %s206, %s207
      %p216 = scmp.eq.s32.totalorder %s22, 0
      %p217 = por %p215, %p216
      %p218 = scmp.ne.s32.totalorder %s206, %s207
      %p219 = scmp.eq.s32.totalorder %s23, 7
      %p220 = por %p218, %p219
      %p222 = scmp.ne.s32.totalorder %s207, %s221
      %p223 = scmp.eq.s32.totalorder %s23, 0
      %p224 = por %p222, %p223
      %s225 = ssub.s32 %s24, %s36
      %p226 = scmp.eq.s32.totalorder %s225, 0
      %s228 = sadd.s32 %s227, 1
      %s229 = scalar_select %p226, %s227, %s228
      %p232 = pneg %p226
      %p233 = scmp.eq.s32.totalorder %s17, 7
      %p234 = por %p232, %p233
      %p235 = scmp.ne.s32.totalorder %s227, %s230
      %p236 = scmp.eq.s32.totalorder %s17, 0
      %p237 = por %p235, %p236
      %p238 = scmp.ne.s32.totalorder %s227, %s230
      %p239 = scmp.eq.s32.totalorder %s22, 7
      %p240 = por %p238, %p239
      %p241 = scmp.ne.s32.totalorder %s230, %s231
      %p242 = scmp.eq.s32.totalorder %s22, 0
      %p243 = por %p241, %p242
      %p244 = scmp.ne.s32.totalorder %s230, %s231
      %p245 = scmp.eq.s32.totalorder %s23, 7
      %p246 = por %p244, %p245
      %p248 = scmp.ne.s32.totalorder %s231, %s247
      %p249 = scmp.eq.s32.totalorder %s23, 0
      %p250 = por %p248, %p249
      %p251 = scmp.le.s32.totalorder 1, %s17
      %p252 = scmp.lt.s32.totalorder %s17, 9
      %p253 = pnand %p251, %p252
      %p254 = pneg %p253
      // Predicated region
      $region9: #{tpu_custom_call.1} parent=5 // pred_check
        _
      $region10: #{tpu_custom_call.1} parent=5 // pred_check_branch
        %256 = sbr.rel (%p253) target = $region12
      $region11: #{tpu_custom_call.1} parent=5 // pred_region
        %s257 = ssub.s32 %s17, 1
        // Predicated region
        $region13: #{tpu_custom_call.1} parent=11 // pred_check
          %p258 = pneg %p76
        $region14: #{tpu_custom_call.1} parent=11 // pred_check_branch
          %260 = sbr.rel (%p258) target = $region16
        $region15: #{tpu_custom_call.1} parent=11 // pred_region
          _
        $region16: #{tpu_custom_call.1} parent=11 // pred_fallthru
          _
        // Predicated region
        $region17: #{tpu_custom_call.1} parent=11 // pred_check
          %p261 = pneg %p97
        $region18: #{tpu_custom_call.1} parent=11 // pred_check_branch
          %263 = sbr.rel (%p261) target = $region20
        $region19: #{tpu_custom_call.1} parent=11 // pred_region
          _
        $region20: #{tpu_custom_call.1} parent=11 // pred_fallthru
          _
        // Predicated region
        $region21: #{tpu_custom_call.1} parent=11 // pred_check
          %p264 = pneg %p118
        $region22: #{tpu_custom_call.1} parent=11 // pred_check_branch
          %266 = sbr.rel (%p264) target = $region24
        $region23: #{tpu_custom_call.1} parent=11 // pred_region
          _
        $region24: #{tpu_custom_call.1} parent=11 // pred_fallthru
          _
        // Predicated region
        $region25: #{tpu_custom_call.1} parent=11 // pred_check
          %p267 = pneg %p217
        $region26: #{tpu_custom_call.1} parent=11 // pred_check_branch
          %269 = sbr.rel (%p267) target = $region28
        $region27: #{tpu_custom_call.1} parent=11 // pred_region
          _
        $region28: #{tpu_custom_call.1} parent=11 // pred_fallthru
          _
      $region12: #{tpu_custom_call.1} parent=5 // pred_fallthru
        _
      %p270 = scmp.lt.s32.totalorder %s17, 8
      // Predicated region
      $region29: #{tpu_custom_call.1} parent=5 // pred_check
        %p271 = pneg %p270
      $region30: #{tpu_custom_call.1} parent=5 // pred_check_branch
        %273 = sbr.rel (%p271) target = $region32
      $region31: #{tpu_custom_call.1} parent=5 // pred_region
        // Predicated region
        $region33: #{tpu_custom_call.1} parent=31 // pred_check
          %p274 = pneg %p49
        $region34: #{tpu_custom_call.1} parent=31 // pred_check_branch
          %276 = sbr.rel (%p274) target = $region36
        $region35: #{tpu_custom_call.1} parent=31 // pred_region
          %p277 = scmp.lt.s32.totalorder %s24, 1
          %s278 = scalar_select %p277, %s24, 1
          %s279 = smul.addr %s278, 8
          %s280 = scalar_lea.vmem %s0, %s279
        $region36: #{tpu_custom_call.1} parent=31 // pred_fallthru
          _
        // Predicated region
        $region37: #{tpu_custom_call.1} parent=31 // pred_check
          %p281 = pneg %p138
        $region38: #{tpu_custom_call.1} parent=31 // pred_check_branch
          %283 = sbr.rel (%p281) target = $region40
        $region39: #{tpu_custom_call.1} parent=31 // pred_region
          %p284 = scmp.lt.s32.totalorder %s25, 3
          %s285 = scalar_select %p284, %s25, 3
          %s286 = smul.addr %s285, 4
          %s287 = smul.addr %s286, 4
          %s288 = scalar_lea.vmem %s4, %s287
        $region40: #{tpu_custom_call.1} parent=31 // pred_fallthru
          _
        // Predicated region
        $region41: #{tpu_custom_call.1} parent=31 // pred_check
          %p289 = pneg %p164
        $region42: #{tpu_custom_call.1} parent=31 // pred_check_branch
          %291 = sbr.rel (%p289) target = $region44
        $region43: #{tpu_custom_call.1} parent=31 // pred_region
          %p292 = scmp.lt.s32.totalorder %s25, 3
          %s293 = scalar_select %p292, %s25, 3
          %s294 = scalar_lea.vmem %s5, %s293
        $region44: #{tpu_custom_call.1} parent=31 // pred_fallthru
          _
        // Predicated region
        $region45: #{tpu_custom_call.1} parent=31 // pred_check
          %p295 = pneg %p190
        $region46: #{tpu_custom_call.1} parent=31 // pred_check_branch
          %297 = sbr.rel (%p295) target = $region48
        $region47: #{tpu_custom_call.1} parent=31 // pred_region
          %p298 = scmp.lt.s32.totalorder %s25, 3
          %s299 = scalar_select %p298, %s25, 3
          %s300 = smul.addr %s299, 4
          %s301 = scalar_lea.vmem %s6, %s300
        $region48: #{tpu_custom_call.1} parent=31 // pred_fallthru
          _
      $region32: #{tpu_custom_call.1} parent=5 // pred_fallthru
        _
      %p302 = scmp.le.s32.totalorder 1, %s17
      %p303 = scmp.lt.s32.totalorder %s17, 9
      %p304 = pnand %p302, %p303
      %p305 = pneg %p304
      // Predicated region
      $region49: #{tpu_custom_call.1} parent=5 // pred_check
        _
      $region50: #{tpu_custom_call.1} parent=5 // pred_check_branch
        %307 = sbr.rel (%p304) target = $region52
      $region51: #{tpu_custom_call.1} parent=5 // pred_region
        %s308 = ssub.s32 %s17, 1
        %p309 = scmp.lt.s32.totalorder %s26, 1
        %s310 = scalar_select %p309, %s26, 1
        %s311 = smul.addr %s310, 8
        %s312 = scalar_lea.vmem %s0, %s311
        %p313 = pneg %p55
        %p314 = pneg %p52
        %p315 = pneg %p76
        %p316 = pneg %p73
        %p317 = pneg %p97
        %p318 = pneg %p94
        %p319 = pneg %p118
        %p320 = pneg %p115
        %p321 = scmp.lt.s32.totalorder %s27, 3
        %s322 = scalar_select %p321, %s27, 3
        %s323 = smul.addr %s322, 4
        %s324 = smul.addr %s323, 4
        %s325 = scalar_lea.vmem %s4, %s324
        %p326 = pneg %p144
        %p327 = pneg %p141
        %p328 = scmp.lt.s32.totalorder %s27, 3
        %s329 = scalar_select %p328, %s27, 3
        %s330 = scalar_lea.vmem %s5, %s329
        %p331 = pneg %p170
        %p332 = pneg %p167
        %p333 = scmp.lt.s32.totalorder %s27, 3
        %s334 = scalar_select %p333, %s27, 3
        %s335 = smul.addr %s334, 4
        %s336 = scalar_lea.vmem %s6, %s335
        %p337 = pneg %p196
        %p338 = pneg %p193
        %p339 = pneg %p217
        %p340 = pneg %p214
        %p341 = pneg %p243
        %p342 = pneg %p240
        %s343 = sand.u32 %s230, 1
        %s344 = scalar_lea.sflag [#allocation5], %s343
        %s345 = sand.u32 %s230, 1
        %s346 = smul.addr %s345, 8
        %s347 = scalar_lea.vmem [#allocation4], %s346
        %p348 = scmp.lt.s32.totalorder %s26, 1
        %s349 = scalar_select %p348, %s26, 1
        %s350 = smul.addr %s349, 8
        %s351 = scalar_lea.vmem %s0, %s350
        %p352 = scmp.lt.s32.totalorder %s27, 3
        %s353 = scalar_select %p352, %s27, 3
        %s354 = smul.addr %s353, 4
        %s355 = smul.addr %s354, 4
        %s356 = scalar_lea.vmem %s4, %s355
        %p357 = scmp.lt.s32.totalorder %s27, 3
        %s358 = scalar_select %p357, %s27, 3
        %s359 = scalar_lea.vmem %s5, %s358
        %p360 = scmp.lt.s32.totalorder %s27, 3
        %s361 = scalar_select %p360, %s27, 3
        %s362 = smul.addr %s361, 4
        %s363 = scalar_lea.vmem %s6, %s362
        %p365 = scmp.eq.s32.totalorder %s27, 0
        // Predicated region
        $region53: #{tpu_custom_call.1} parent=51 // pred_check
          %p366 = pneg %p365
        $region54: #{tpu_custom_call.1} parent=51 // pred_check_branch
          %368 = sbr.rel (%p366) target = $region56
        $region55: #{tpu_custom_call.1} parent=51 // pred_region
          %v369 = vld [vmem:[%s351] sm:$0xff]
          %v370 = vld [vmem:[%s2] sm:$0x1]
          %v371 = vld [vmem:[%s3] sm:$0x1]
          %vm372 = vcmask 261120
          %v373 = vsel %vm372, %v369, 0.0
          %374 = vadd.xlane.f32.xlu0 %v373
          %v375 = vpop.xlane.xlu0 %374
          %v376 = vrcp.pop 32.0
          %v377 = vmul.f32 %v375, %v376
          %v378 = vsub.f32 %v369, %v377
          %v379 = vmul.f32 %v378, %v378
          %v380 = vsel %vm372, %v379, 0.0
          %381 = vadd.xlane.f32.xlu0 %v380
          %v382 = vpop.xlane.xlu0 %381
          %v383 = vmul.f32 %v382, %v376
          %v384 = vadd.f32 %v383, 1e-05
          %v385 = vrsqrt.pop %v384
          %v386 = vmul.f32 %v378, %v385
          %v388 = vlaneseq
          %v389 = vshrl.u32 %v388, 7
          %v390 = vsub.s32 0, %v389
          %v391 = vrot.slane %v370, %v390
          %v393 = vmul.f32 %v386, %v391
          %v395 = vlaneseq
          %v396 = vshrl.u32 %v395, 7
          %v397 = vsub.s32 0, %v396
          %v398 = vrot.slane %v371, %v397
          %v400 = vadd.f32 %v393, %v398
          %v401 = vpack.c.bf16 %v400, %v400
          %vm402 = vcmask 257024
          %403 = vst.msk [vmem:[#allocation2] sm:$0xf] %vm402, %v401
          %v404 = vld [vmem:[%s7] sm:$0x1]
          %v406 = vlaneseq
          %v407 = vshrl.u32 %v406, 7
          %v408 = vsub.s32 0, %v407
          %v409 = vrot.slane %v404, %v408
          %v411 = vadd.f32 %v369, %v409
          %412 = vst.msk [vmem:[#allocation3] sm:$0xff] %vm372, %v411
        $region56: #{tpu_custom_call.1} parent=51 // pred_fallthru
          _
        %v413 = vld [vmem:[#allocation2] sm:$0xf]
        %v414 = vld [vmem:[%s356] sm:$0xf]
        %v415 = vld [vmem:[%s356 + $0x4] sm:$0xf]
        %v416 = vld [vmem:[%s356 + $0x8] sm:$0xf]
        %v417 = vld [vmem:[%s356 + $0xc] sm:$0xf]
        %v418 = vld [vmem:[%s359] sm:$0x1]
        %v420 = vlaneseq
        %v421 = vshrl.u32 %v420, 7
        %v422 = vsub.s32 0, %v421
        %v423 = vrot.slane %v418, %v422
        %v429 = vunpack.c.l.b16 %v414
        %v430 = vunpack.c.l.b16 %v415
        %v431 = vunpack.c.l.b16 %v416
        %v432 = vunpack.c.l.b16 %v417
        %v433 = vpack.c.b16 %v430, %v429
        %v434 = vpack.c.b16 %v432, %v431
        %vm437 = vcmask 261120
        %v439 = vsel %vm437, %v413, 0
        %441 = vmatprep.subr.bf16.mxu0 0
        %442 = vmatpush1.bf16.msra.mxu0 %v433
        %443 = vmatprep.subr.bf16.mxu0 0
        %444 = vmatpush1.bf16.msra.mxu0 %v434
        %445 = vmatprep.subr.bf16.mxu0 0
        %446 = vmatpush1.bf16.msra.mxu0 0
        %447 = vmatprep.subr.bf16.mxu0 0
        %448 = vmatpush1.bf16.msra.mxu0 0
        %449 = vmatprep.subr.bf16.mxu0 0
        %450 = vmatpush1.bf16.msra.mxu0 0
        %451 = vmatprep.subr.bf16.mxu0 0
        %452 = vmatpush1.bf16.msra.mxu0 0
        %453 = vmatprep.subr.bf16.mxu0 0
        %454 = vmatpush1.bf16.msra.mxu0 0
        %455 = vmatprep.subr.bf16.mxu0 0
        %456 = vmatpush1.bf16.msra.mxu0 0
        %457 = vmatprep.subr.bf16.mxu0 0
        %458 = vmatpush1.bf16.msra.mxu0 0
        %459 = vmatprep.subr.bf16.mxu0 0
        %460 = vmatpush1.bf16.msra.mxu0 0
        %461 = vmatprep.subr.bf16.mxu0 0
        %462 = vmatpush1.bf16.msra.mxu0 0
        %463 = vmatprep.subr.bf16.mxu0 0
        %464 = vmatpush1.bf16.msra.mxu0 0
        %465 = vmatprep.subr.bf16.mxu0 0
        %466 = vmatpush1.bf16.msra.mxu0 0
        %467 = vmatprep.subr.bf16.mxu0 0
        %468 = vmatpush1.bf16.msra.mxu0 0
        %469 = vmatprep.subr.bf16.mxu0 0
        %470 = vmatpush1.bf16.msra.mxu0 0
        %471 = vmatprep.subr.bf16.mxu0 0
        %472 = vmatpush1.bf16.msra.mxu0 0
        %473 = vmatprep.mubr.bf16.mxu0 0
        %474 = vmatmul.mubr.bf16.gmra.mrb[0].mxu0 %v439
        %v475 = vpop.f32.mrb[0].mxu0
        %v476 = vadd.f32 %v423, %v475
        %v477 = vpop.f32.mrb[0].mxu0
        %v478 = vpop.f32.mrb[0].mxu0
        %v479 = vpop.f32.mrb[0].mxu0
        %480 = vdwg.mxu0
        %v481 = vpack.c.bf16 %v476, %v476
        %483 = vrot.lane.b32.xlu0 %v481, 120
        %v484 = vpop.permute.xlu0 %483
        %vm485 = vcmask 64512
        %v487 = vsel %vm485, %v481, 0
        %v490 = vsel %vm485, %v484, 0
        %492 = vmatprep.subr.bf16.mxu0 0
        %493 = vmatpush1.bf16.xpose.msra.mxu0 %v490
        %494 = vmatprep.subr.bf16.mxu0 0
        %495 = vmatpush1.bf16.xpose.msra.mxu0 0
        %496 = vmatprep.subr.bf16.mxu0 0
        %497 = vmatpush1.bf16.xpose.msra.mxu0 0
        %498 = vmatprep.subr.bf16.mxu0 0
        %499 = vmatpush1.bf16.xpose.msra.mxu0 0
        %500 = vmatprep.subr.bf16.mxu0 0
        %501 = vmatpush1.bf16.xpose.msra.mxu0 0
        %502 = vmatprep.subr.bf16.mxu0 0
        %503 = vmatpush1.bf16.xpose.msra.mxu0 0
        %504 = vmatprep.subr.bf16.mxu0 0
        %505 = vmatpush1.bf16.xpose.msra.mxu0 0
        %506 = vmatprep.subr.bf16.mxu0 0
        %507 = vmatpush1.bf16.xpose.msra.mxu0 0
        %508 = vmatprep.subr.bf16.mxu0 0
        %509 = vmatpush1.bf16.xpose.msra.mxu0 0
        %510 = vmatprep.subr.bf16.mxu0 0
        %511 = vmatpush1.bf16.xpose.msra.mxu0 0
        %512 = vmatprep.subr.bf16.mxu0 0
        %513 = vmatpush1.bf16.xpose.msra.mxu0 0
        %514 = vmatprep.subr.bf16.mxu0 0
        %515 = vmatpush1.bf16.xpose.msra.mxu0 0
        %516 = vmatprep.subr.bf16.mxu0 0
        %517 = vmatpush1.bf16.xpose.msra.mxu0 0
        %518 = vmatprep.subr.bf16.mxu0 0
        %519 = vmatpush1.bf16.xpose.msra.mxu0 0
        %520 = vmatprep.subr.bf16.mxu0 0
        %521 = vmatpush1.bf16.xpose.msra.mxu0 0
        %522 = vmatprep.subr.bf16.mxu0 0
        %523 = vmatpush1.bf16.xpose.msra.mxu0 0
        %524 = vmatprep.mubr.bf16.mxu0 0
        %525 = vmatmul.mubr.bf16.gmra.mrb[0].mxu0 %v487
        %v526 = vpop.f32.mrb[0].mxu0
        %v527 = vadd.f32 0.0, %v526
        %v528 = vpop.f32.mrb[0].mxu0
        %v529 = vpop.f32.mrb[0].mxu0
        %v530 = vpop.f32.mrb[0].mxu0
        %531 = vdwg.mxu0
        %v532 = vsel %vm485, %v527, -inf
        %533 = vmax.xlane.f32.xlu0 %v532
        %v534 = vpop.xlane.xlu0 %533
        %v535 = vsub.f32 %v527, %v534
        %v536 = vmul.f32 %v535, 1.442695
        %v537 = vpow.pop %v536
        %v538 = vsel %vm485, %v537, 0.0
        %539 = vadd.xlane.f32.xlu0 %v538
        %v540 = vpop.xlane.xlu0 %539
        %v541 = vrcp.pop %v540
        %v542 = vmul.f32 %v537, %v541
        %v543 = vpack.c.bf16 %v542, %v542
        %544 = vrot.lane.b32.xlu0 %v481, 112
        %v545 = vpop.permute.xlu0 %544
        %v547 = vsel %vm485, %v543, 0
        %vm549 = vcmask 1043456
        %v551 = vsel %vm549, %v545, 0
        %553 = vmatprep.subr.bf16.mxu0 0
        %554 = vmatpush1.bf16.msra.mxu0 %v551
        %555 = vmatprep.subr.bf16.mxu0 0
        %556 = vmatpush1.bf16.msra.mxu0 0
        %557 = vmatprep.subr.bf16.mxu0 0
        %558 = vmatpush1.bf16.msra.mxu0 0
        %559 = vmatprep.subr.bf16.mxu0 0
        %560 = vmatpush1.bf16.msra.mxu0 0
        %561 = vmatprep.subr.bf16.mxu0 0
        %562 = vmatpush1.bf16.msra.mxu0 0
        %563 = vmatprep.subr.bf16.mxu0 0
        %564 = vmatpush1.bf16.msra.mxu0 0
        %565 = vmatprep.subr.bf16.mxu0 0
        %566 = vmatpush1.bf16.msra.mxu0 0
        %567 = vmatprep.subr.bf16.mxu0 0
        %568 = vmatpush1.bf16.msra.mxu0 0
        %569 = vmatprep.subr.bf16.mxu0 0
        %570 = vmatpush1.bf16.msra.mxu0 0
        %571 = vmatprep.subr.bf16.mxu0 0
        %572 = vmatpush1.bf16.msra.mxu0 0
        %573 = vmatprep.subr.bf16.mxu0 0
        %574 = vmatpush1.bf16.msra.mxu0 0
        %575 = vmatprep.subr.bf16.mxu0 0
        %576 = vmatpush1.bf16.msra.mxu0 0
        %577 = vmatprep.subr.bf16.mxu0 0
        %578 = vmatpush1.bf16.msra.mxu0 0
        %579 = vmatprep.subr.bf16.mxu0 0
        %580 = vmatpush1.bf16.msra.mxu0 0
        %581 = vmatprep.subr.bf16.mxu0 0
        %582 = vmatpush1.bf16.msra.mxu0 0
        %583 = vmatprep.subr.bf16.mxu0 0
        %584 = vmatpush1.bf16.msra.mxu0 0
        %585 = vmatprep.mubr.bf16.mxu0 0
        %586 = vmatmul.mubr.bf16.gmra.mrb[0].mxu0 %v547
        %v587 = vpop.f32.mrb[0].mxu0
        %v588 = vadd.f32 0.0, %v587
        %v589 = vpop.f32.mrb[0].mxu0
        %v590 = vpop.f32.mrb[0].mxu0
        %v591 = vpop.f32.mrb[0].mxu0
        %592 = vdwg.mxu0
        %v593 = vld [vmem:[#allocation3] sm:$0xff]
        %v594 = vpack.c.bf16 %v588, %v588
        %v595 = vld [vmem:[%s363] sm:$0xf]
        %v597 = vsel %vm485, %v594, 0
        %v600 = vsel %vm549, %v595, 0
        %602 = vmatprep.subr.bf16.mxu0 0
        %603 = vmatpush1.bf16.msra.mxu0 %v600
        %604 = vmatprep.subr.bf16.mxu0 0
        %605 = vmatpush1.bf16.msra.mxu0 0
        %606 = vmatprep.subr.bf16.mxu0 0
        %607 = vmatpush1.bf16.msra.mxu0 0
        %608 = vmatprep.subr.bf16.mxu0 0
        %609 = vmatpush1.bf16.msra.mxu0 0
        %610 = vmatprep.subr.bf16.mxu0 0
        %611 = vmatpush1.bf16.msra.mxu0 0
        %612 = vmatprep.subr.bf16.mxu0 0
        %613 = vmatpush1.bf16.msra.mxu0 0
        %614 = vmatprep.subr.bf16.mxu0 0
        %615 = vmatpush1.bf16.msra.mxu0 0
        %616 = vmatprep.subr.bf16.mxu0 0
        %617 = vmatpush1.bf16.msra.mxu0 0
        %618 = vmatprep.subr.bf16.mxu0 0
        %619 = vmatpush1.bf16.msra.mxu0 0
        %620 = vmatprep.subr.bf16.mxu0 0
        %621 = vmatpush1.bf16.msra.mxu0 0
        %622 = vmatprep.subr.bf16.mxu0 0
        %623 = vmatpush1.bf16.msra.mxu0 0
        %624 = vmatprep.subr.bf16.mxu0 0
        %625 = vmatpush1.bf16.msra.mxu0 0
        %626 = vmatprep.subr.bf16.mxu0 0
        %627 = vmatpush1.bf16.msra.mxu0 0
        %628 = vmatprep.subr.bf16.mxu0 0
        %629 = vmatpush1.bf16.msra.mxu0 0
        %630 = vmatprep.subr.bf16.mxu0 0
        %631 = vmatpush1.bf16.msra.mxu0 0
        %632 = vmatprep.subr.bf16.mxu0 0
        %633 = vmatpush1.bf16.msra.mxu0 0
        %634 = vmatprep.mubr.bf16.mxu0 0
        %635 = vmatmul.mubr.bf16.gmra.mrb[0].mxu0 %v597
        %v636 = vpop.f32.mrb[0].mxu0
        %v637 = vadd.f32 0.0, %v636
        %v638 = vpop.f32.mrb[0].mxu0
        %v639 = vpop.f32.mrb[0].mxu0
        %v640 = vpop.f32.mrb[0].mxu0
        %641 = vdwg.mxu0
        %v642 = vadd.f32 %v593, %v637
        %643 = vst.msk [vmem:[#allocation3] sm:$0xff] %vm437, %v642
        %p644 = scmp.eq.s32.totalorder %s27, 3
        // Predicated region
        $region57: #{tpu_custom_call.1} parent=51 // pred_check
          %p645 = pneg %p644
        $region58: #{tpu_custom_call.1} parent=51 // pred_check_branch
          %647 = sbr.rel (%p645) target = $region60
        $region59: #{tpu_custom_call.1} parent=51 // pred_region
          %v648 = vld [vmem:[#allocation3] sm:$0xff]
          %649 = vst.msk [vmem:[%s347] sm:$0xff] %vm437, %v648
        $region60: #{tpu_custom_call.1} parent=51 // pred_fallthru
          _
        %s650 = sand.u32 %s230, 1
        %s651 = scalar_lea.sflag [#allocation5], %s650
        %s652 = sand.u32 %s230, 1
        %s653 = smul.addr %s652, 8
        %s654 = scalar_lea.vmem [#allocation4], %s653
        // Predicated region
        $region61: #{tpu_custom_call.1} parent=51 // pred_check
          %p655 = pneg %p240
        $region62: #{tpu_custom_call.1} parent=51 // pred_check_branch
          %657 = sbr.rel (%p655) target = $region64
        $region63: #{tpu_custom_call.1} parent=51 // pred_region
          %s659 = ssub.s32 128, 128
          %660 = vsyncadd %s651, %s659
          %s661 = smul.addr %s26, 128
          %s662 = scalar_lea.hbm %s8, %s661
          %s664 = sshll.u32 %s654, 4
          %s665 = int_to_ptr.vmem [resolvable:$true] %s664
          %667 = dma.vmem_to_hbm [thread:$0]  %s665, 128, %s662, %s651
        $region64: #{tpu_custom_call.1} parent=51 // pred_fallthru
          _
      $region52: #{tpu_custom_call.1} parent=5 // pred_fallthru
        _
      %p668 = scmp.le.s32.totalorder 2, %s17
      // Predicated region
      $region65: #{tpu_custom_call.1} parent=5 // pred_check
        %p669 = pneg %p668
      $region66: #{tpu_custom_call.1} parent=5 // pred_check_branch
        %671 = sbr.rel (%p669) target = $region68
      $region67: #{tpu_custom_call.1} parent=5 // pred_region
        %s672 = ssub.s32 %s17, 2
        // Predicated region
        $region69: #{tpu_custom_call.1} parent=67 // pred_check
          %p673 = pneg %p246
        $region70: #{tpu_custom_call.1} parent=67 // pred_check_branch
          %675 = sbr.rel (%p673) target = $region72
        $region71: #{tpu_custom_call.1} parent=67 // pred_region
          %s676 = sand.u32 %s231, 1
          %s677 = scalar_lea.sflag [#allocation5], %s676
          %s678 = sand.u32 %s231, 1
          %s679 = smul.addr %s678, 8
          %s680 = scalar_lea.vmem [#allocation4], %s679
          %681 = dma.done %s677, 128
        $region72: #{tpu_custom_call.1} parent=67 // pred_fallthru
          _
      $region68: #{tpu_custom_call.1} parent=5 // pred_fallthru
        _
    $region6: #{tpu_custom_call.1} parent=1 // loop_footer
      %s21 = sadd.s32 1, %s17
    $region7: #{tpu_custom_call.1} parent=1 // loop_footer_branch
      %16 = sbr.rel target = $region3
    $region8: #{tpu_custom_call.1} parent=1 // loop_exit
      _
    %682 = vsyncpa [#allocation5], 1
    %s683 = scalar_lea.sflag [#allocation5], 1
    %684 = vsyncpa %s683, 1

</llo_original>
